<compile_context>
chip_gen: v7x
topology: tpu7x:2x2x1
jax: 0.10.0
libtpu: 0.0.40
codegen_flags: <defaults>
</compile_context>

<pallas_src>
import functools

import jax
import jax.numpy as jnp
from jax.experimental import pallas as pl
from jax.experimental.pallas import tpu as pltpu


def _round_up(x: int, m: int) -> int:
    return ((x + m - 1) // m) * m


# ----------------------------------------------------------------------------
# Kernel
# ----------------------------------------------------------------------------
def padded_event_encoder_kernel(x_ref, w_in_ref, b_in_ref,
                                w_h_ref, b_h_ref,
                                w_out_ref, b_out_ref,
                                o_ref):
    # x, weights are bf16; dots accumulate in f32 on the MXU.
    x = x_ref[...]

    # input layer + ReLU (dropout p=0 is identity)
    h = jnp.dot(x, w_in_ref[...], preferred_element_type=jnp.float32)
    h = jnp.maximum(h + b_in_ref[...], 0.0)

    # single hidden linear (num_hidden=2 -> one layer in self.linears) + ReLU
    h = jnp.dot(h.astype(jnp.bfloat16), w_h_ref[...],
                preferred_element_type=jnp.float32)
    h = jnp.maximum(h + b_h_ref[...], 0.0)

    # output layer; weights/bias already zero-padded to a 128-multiple width,
    # so this also produces the F.pad zeros exactly (0*h + 0 == 0).
    out = jnp.dot(h.astype(jnp.bfloat16), w_out_ref[...],
                  preferred_element_type=jnp.float32)
    o_ref[...] = (out + b_out_ref[...]).astype(o_ref.dtype)


# ----------------------------------------------------------------------------
# Parameter preparation (one-time, hoisted out of the per-call path)
# ----------------------------------------------------------------------------
def prepare_params(params, size_out: int, size_embedding: int):
    """Pad the output projection to a lane-dense (128-multiple) width covering
    size_embedding, and cast MXU operands (weights) to bf16. Biases stay f32."""
    e_pad = _round_up(size_embedding, 128)
    w_out_p = jnp.pad(params["w_out"], ((0, 0), (0, e_pad - size_out)))
    b_out_p = jnp.pad(params["b_out"], ((0, 0), (0, e_pad - size_out)))
    return {
        "w_in": params["w_in"].astype(jnp.bfloat16),
        "b_in": params["b_in"].astype(jnp.float32),
        "w_h": params["w_h"].astype(jnp.bfloat16),
        "b_h": params["b_h"].astype(jnp.float32),
        "w_out": w_out_p.astype(jnp.bfloat16),
        "b_out": b_out_p.astype(jnp.float32),
        "e_pad": e_pad,
    }


# ----------------------------------------------------------------------------
# Wrapper
# ----------------------------------------------------------------------------
@functools.partial(jax.jit, static_argnames=("size_out", "size_embedding", "tb_max"))
def padded_event_encoder(x, prepped, size_out: int, size_embedding: int,
                         tb_max: int = 1024):
    """x: (B, num_features) f32. prepped: output of prepare_params."""
    B, F = x.shape
    H = prepped["w_in"].shape[1]
    e_pad = prepped["w_out"].shape[1]

    # Batch tile: large enough to amortize per-step overhead, multiple of 8.
    tb = min(tb_max, _round_up(B, 8))
    Bp = _round_up(B, tb)

    xb = x.astype(jnp.bfloat16)
    if Bp != B:
        xb = jnp.pad(xb, ((0, Bp - B), (0, 0)))

    grid = (Bp // tb,)
    const = lambda i: (0, 0)  # weights/biases: one resident VMEM block

    y = pl.pallas_call(
        padded_event_encoder_kernel,
        out_shape=jax.ShapeDtypeStruct((Bp, e_pad), jnp.float32),
        grid=grid,
        in_specs=[
            pl.BlockSpec((tb, F), lambda i: (i, 0)),   # x: tiled over batch
            pl.BlockSpec((F, H), const),               # w_in
            pl.BlockSpec((1, H), const),               # b_in
            pl.BlockSpec((H, H), const),               # w_h
            pl.BlockSpec((1, H), const),               # b_h
            pl.BlockSpec((H, e_pad), const),           # w_out (padded)
            pl.BlockSpec((1, e_pad), const),           # b_out (padded)
        ],
        out_specs=pl.BlockSpec((tb, e_pad), lambda i: (i, 0)),
        compiler_params=pltpu.CompilerParams(
            dimension_semantics=("parallel",),
            vmem_limit_bytes=48 * 1024 * 1024,
        ),
    )(xb, prepped["w_in"], prepped["b_in"],
      prepped["w_h"], prepped["b_h"],
      prepped["w_out"], prepped["b_out"])

    # Back to the module's exact output shape (B, size_embedding).
    return y[:B, :size_embedding]


# ----------------------------------------------------------------------------
# Synthetic params + reference
# ----------------------------------------------------------------------------
def make_params(key, num_features, hidden_size, size_out):
    """Deterministic synthetic parameters (torch Linear shapes, transposed)."""
    ks = jax.random.split(key, 6)
    scale = 0.1
    return {
        # (in_features, out_features) layout == torch weight.T
        "w_in":  scale * jax.random.normal(ks[0], (num_features, hidden_size), jnp.float32),
        "b_in":  scale * jax.random.normal(ks[1], (1, hidden_size), jnp.float32),
        "w_h":   scale * jax.random.normal(ks[2], (hidden_size, hidden_size), jnp.float32),
        "b_h":   scale * jax.random.normal(ks[3], (1, hidden_size), jnp.float32),
        "w_out": scale * jax.random.normal(ks[4], (hidden_size, size_out), jnp.float32),
        "b_out": scale * jax.random.normal(ks[5], (1, size_out), jnp.float32),
    }


def reference_jax(x, params, size_out, size_embedding):
    h = jnp.maximum(x @ params["w_in"] + params["b_in"], 0.0)
    h = jnp.maximum(h @ params["w_h"] + params["b_h"], 0.0)
    out = h @ params["w_out"] + params["b_out"]
    return jnp.pad(out, ((0, 0), (0, size_embedding - size_out)))


if __name__ == "__main__":
    # Module config: num_features=16, size_out=24, size_embedding=40,
    # num_hidden=2 (-> exactly one layer in self.linears), hidden_size=32, p=0.
    # TODO(synk): nn.Dropout with p>0 (training mode) is not implemented; p=0
    # makes it the identity as in eval.
    num_features, hidden_size = 16, 32
    size_out, size_embedding = 24, 40
    batch = 8

    key = jax.random.PRNGKey(0)
    kx, kp = jax.random.split(key)
    x = jax.random.normal(kx, (batch, num_features), jnp.float32)
    params = make_params(kp, num_features, hidden_size, size_out)
    prepped = prepare_params(params, size_out, size_embedding)

    y = padded_event_encoder(x, prepped, size_out, size_embedding)
    y = jax.block_until_ready(y)

    y_ref = reference_jax(x, params, size_out, size_embedding)
    assert y.shape == (batch, size_embedding)
    # bf16 MXU inputs -> loosened tolerance vs the f32 reference.
    assert jnp.allclose(y, y_ref, atol=1e-2, rtol=1e-2), "mismatch vs reference"
    # padded region must be exactly zero
    assert jnp.all(y[:, size_out:] == 0.0)

    print("KERNEL_OK")
</pallas_src>

<mosaic_0001>
module attributes {stable_mosaic.version = 11 : i64} {
  func.func @padded_event_encoder_kernel(%arg0: i32, %arg1: memref<8x16xbf16, #tpu.memory_space<vmem>>, %arg2: memref<16x32xbf16, #tpu.memory_space<vmem>>, %arg3: memref<1x32xf32, #tpu.memory_space<vmem>>, %arg4: memref<32x32xbf16, #tpu.memory_space<vmem>>, %arg5: memref<1x32xf32, #tpu.memory_space<vmem>>, %arg6: memref<32x128xbf16, #tpu.memory_space<vmem>>, %arg7: memref<1x128xf32, #tpu.memory_space<vmem>>, %arg8: memref<8x128xf32, #tpu.memory_space<vmem>>) attributes {dimension_semantics = [#tpu.dimension_semantics<parallel>], iteration_bounds = array<i64: 1>, scalar_prefetch = 0 : i64, scratch_operands = 0 : i64, tpu.core_type = #tpu.core_type<tc>, window_params = [{transform_indices = @transform_0, window_bounds = array<i64: 8, 16>}, {pipeline_mode = #tpu.pipeline_mode<synchronous>, transform_indices = @transform_1, window_bounds = array<i64: 16, 32>}, {pipeline_mode = #tpu.pipeline_mode<synchronous>, transform_indices = @transform_2, window_bounds = array<i64: 1, 32>}, {pipeline_mode = #tpu.pipeline_mode<synchronous>, transform_indices = @transform_3, window_bounds = array<i64: 32, 32>}, {pipeline_mode = #tpu.pipeline_mode<synchronous>, transform_indices = @transform_4, window_bounds = array<i64: 1, 32>}, {pipeline_mode = #tpu.pipeline_mode<synchronous>, transform_indices = @transform_5, window_bounds = array<i64: 32, 128>}, {pipeline_mode = #tpu.pipeline_mode<synchronous>, transform_indices = @transform_6, window_bounds = array<i64: 1, 128>}, {transform_indices = @transform_7, window_bounds = array<i64: 8, 128>}]} {
    %c0 = arith.constant 0 : index
    %c0_0 = arith.constant 0 : index
    %0 = vector.load %arg1[%c0, %c0_0] : memref<8x16xbf16, #tpu.memory_space<vmem>>, vector<8x16xbf16>
    %c0_1 = arith.constant 0 : index
    %c0_2 = arith.constant 0 : index
    %1 = vector.load %arg2[%c0_1, %c0_2] : memref<16x32xbf16, #tpu.memory_space<vmem>>, vector<16x32xbf16>
    %cst = arith.constant dense<0.000000e+00> : vector<8x32xf32>
    %2 = tpu.matmul %0, %1, %cst {dimension_numbers = #tpu.dot_dimension_numbers<[1], [0], [0], [1], [0, 0, 1, 1], [], []>} : vector<8x16xbf16>, vector<16x32xbf16>, vector<8x32xf32> -> vector<8x32xf32>
    %c0_3 = arith.constant 0 : index
    %c0_4 = arith.constant 0 : index
    %3 = vector.load %arg3[%c0_3, %c0_4] : memref<1x32xf32, #tpu.memory_space<vmem>>, vector<1x32xf32>
    %4 = vector.broadcast %3 : vector<1x32xf32> to vector<8x32xf32>
    %5 = arith.addf %2, %4 : vector<8x32xf32>
    %cst_5 = arith.constant 0.000000e+00 : f32
    %6 = vector.broadcast %cst_5 : f32 to vector<8x32xf32>
    %7 = arith.maximumf %5, %6 : vector<8x32xf32>
    %8 = arith.truncf %7 : vector<8x32xf32> to vector<8x32xbf16>
    %c0_6 = arith.constant 0 : index
    %c0_7 = arith.constant 0 : index
    %9 = vector.load %arg4[%c0_6, %c0_7] : memref<32x32xbf16, #tpu.memory_space<vmem>>, vector<32x32xbf16>
    %cst_8 = arith.constant dense<0.000000e+00> : vector<8x32xf32>
    %10 = tpu.matmul %8, %9, %cst_8 {dimension_numbers = #tpu.dot_dimension_numbers<[1], [0], [0], [1], [0, 0, 1, 1], [], []>} : vector<8x32xbf16>, vector<32x32xbf16>, vector<8x32xf32> -> vector<8x32xf32>
    %c0_9 = arith.constant 0 : index
    %c0_10 = arith.constant 0 : index
    %11 = vector.load %arg5[%c0_9, %c0_10] : memref<1x32xf32, #tpu.memory_space<vmem>>, vector<1x32xf32>
    %12 = vector.broadcast %11 : vector<1x32xf32> to vector<8x32xf32>
    %13 = arith.addf %10, %12 : vector<8x32xf32>
    %cst_11 = arith.constant 0.000000e+00 : f32
    %14 = vector.broadcast %cst_11 : f32 to vector<8x32xf32>
    %15 = arith.maximumf %13, %14 : vector<8x32xf32>
    %16 = arith.truncf %15 : vector<8x32xf32> to vector<8x32xbf16>
    %c0_12 = arith.constant 0 : index
    %c0_13 = arith.constant 0 : index
    %17 = vector.load %arg6[%c0_12, %c0_13] : memref<32x128xbf16, #tpu.memory_space<vmem>>, vector<32x128xbf16>
    %cst_14 = arith.constant dense<0.000000e+00> : vector<8x128xf32>
    %18 = tpu.matmul %16, %17, %cst_14 {dimension_numbers = #tpu.dot_dimension_numbers<[1], [0], [0], [1], [0, 0, 1, 1], [], []>} : vector<8x32xbf16>, vector<32x128xbf16>, vector<8x128xf32> -> vector<8x128xf32>
    %c0_15 = arith.constant 0 : index
    %c0_16 = arith.constant 0 : index
    %19 = vector.load %arg7[%c0_15, %c0_16] : memref<1x128xf32, #tpu.memory_space<vmem>>, vector<1x128xf32>
    %20 = vector.broadcast %19 : vector<1x128xf32> to vector<8x128xf32>
    %21 = arith.addf %18, %20 : vector<8x128xf32>
    %c0_17 = arith.constant 0 : index
    %c0_18 = arith.constant 0 : index
    %22 = vector.load %arg8[%c0_17, %c0_18] : memref<8x128xf32, #tpu.memory_space<vmem>>, vector<8x128xf32>
    tpu.vector_store %arg8[%c0_17, %c0_18], %21 {strides = array<i32>} : memref<8x128xf32, #tpu.memory_space<vmem>>, vector<8x128xf32>,
    return
  }
  func.func @transform_0(%arg0: i32) -> (i32, i32) {
    %c0_i32 = arith.constant 0 : i32
    %c0_i32_0 = arith.constant 0 : i32
    return %arg0, %c0_i32 : i32, i32
  }
  func.func @transform_1(%arg0: i32) -> (i32, i32) {
    %c0_i32 = arith.constant 0 : i32
    %c0_i32_0 = arith.constant 0 : i32
    %c0_i32_1 = arith.constant 0 : i32
    return %c0_i32, %c0_i32_0 : i32, i32
  }
  func.func @transform_2(%arg0: i32) -> (i32, i32) {
    %c0_i32 = arith.constant 0 : i32
    %c0_i32_0 = arith.constant 0 : i32
    %c0_i32_1 = arith.constant 0 : i32
    return %c0_i32, %c0_i32_0 : i32, i32
  }
  func.func @transform_3(%arg0: i32) -> (i32, i32) {
    %c0_i32 = arith.constant 0 : i32
    %c0_i32_0 = arith.constant 0 : i32
    %c0_i32_1 = arith.constant 0 : i32
    return %c0_i32, %c0_i32_0 : i32, i32
  }
  func.func @transform_4(%arg0: i32) -> (i32, i32) {
    %c0_i32 = arith.constant 0 : i32
    %c0_i32_0 = arith.constant 0 : i32
    %c0_i32_1 = arith.constant 0 : i32
    return %c0_i32, %c0_i32_0 : i32, i32
  }
  func.func @transform_5(%arg0: i32) -> (i32, i32) {
    %c0_i32 = arith.constant 0 : i32
    %c0_i32_0 = arith.constant 0 : i32
    %c0_i32_1 = arith.constant 0 : i32
    return %c0_i32, %c0_i32_0 : i32, i32
  }
  func.func @transform_6(%arg0: i32) -> (i32, i32) {
    %c0_i32 = arith.constant 0 : i32
    %c0_i32_0 = arith.constant 0 : i32
    %c0_i32_1 = arith.constant 0 : i32
    return %c0_i32, %c0_i32_0 : i32, i32
  }
  func.func @transform_7(%arg0: i32) -> (i32, i32) {
    %c0_i32 = arith.constant 0 : i32
    %c0_i32_0 = arith.constant 0 : i32
    return %arg0, %c0_i32 : i32, i32
  }
}

</mosaic_0001>

<llo_original>
// kernel: padded_event_encoder.1
$region0: #{padded_event_encoder.1}
  #allocation0 [shape = 'u32[]', space=smem, size = 0x4, offset = 0x4, fixed_abs, tag = 'smem constant byte address 0x4 - core index']
  #allocation1 [shape = 'u32[144,128]{1,0:T(1,128)}', space=vmem, size = 0x12000, scoped, tag = 'internal scratch']
  %s0 = inlined_call_operand.vmem [shape: bf16[8,16], index: 0, kind: input, shape index: {}]
  %s1 = inlined_call_operand.hbm [shape: bf16[16,32], index: 1, kind: input, shape index: {}]
  %s2 = inlined_call_operand.vmem [shape: f32[1,32], index: 2, kind: input, shape index: {}]
  %s3 = inlined_call_operand.vmem [shape: bf16[32,32], index: 3, kind: input, shape index: {}]
  %s4 = inlined_call_operand.vmem [shape: f32[1,32], index: 4, kind: input, shape index: {}]
  %s5 = inlined_call_operand.vmem [shape: bf16[32,128], index: 5, kind: input, shape index: {}]
  %s6 = inlined_call_operand.hbm [shape: f32[1,128], index: 6, kind: input, shape index: {}]
  %s7 = inlined_call_operand.hbm [shape: f32[8,128], index: 7, kind: output, shape index: {}]
  %s8 = sld [smem:[#allocation0]]
  $region46: #{padded_event_encoder.1} parent=0
    _
  %s10 = ssub.s32 1, %s8
  %s11 = scalar_select 0, %s10, %s8
  $region1: #{padded_event_encoder.1} parent=0
    #allocation2 [shape = 'u8[4096]{0}', space=vmem, size = 0x1000, scoped, tag = 'input window, operand 1, single buffered']
    #allocation3 [shape = 's32[1]{0}', space=sflag, size = 0x4, scoped, tag = 'scoped memory for padded_event_encoder.1']
    #allocation4 [shape = 's32[1]{0}', space=sflag, size = 0x4, scoped, tag = 'scoped memory for padded_event_encoder.1']
    #allocation5 [shape = 'u8[512]{0}', space=vmem, size = 0x400, scoped, tag = 'input window, operand 6, single buffered']
    #allocation6 [shape = 's32[1]{0}', space=sflag, size = 0x4, scoped, tag = 'scoped memory for padded_event_encoder.1']
    #allocation7 [shape = 'u8[4096]{0}', space=vmem, size = 0x1000, scoped, tag = 'output window, operand 0, single buffered']
    %12 = vsyncpa [#allocation3], 0
    %13 = vsyncpa [#allocation6], 0
    %14 = vsyncpa [#allocation4], 0
    // Predicated region
    $region2: #{padded_event_encoder.1} parent=1 // pred_check
      _
    $region3: #{padded_event_encoder.1} parent=1 // pred_check_branch
      %16 = sbr.rel (0) target = $region5
    $region4: #{padded_event_encoder.1} parent=1 // pred_region
      _
    $region5: #{padded_event_encoder.1} parent=1 // pred_fallthru
      _
    // Predicated region
    $region6: #{padded_event_encoder.1} parent=1 // pred_check
      _
    $region7: #{padded_event_encoder.1} parent=1 // pred_check_branch
      %18 = sbr.rel (0) target = $region9
    $region8: #{padded_event_encoder.1} parent=1 // pred_region
      %s20 = ssub.s32 128, 128
      %21 = vsyncadd [#allocation3], %s20
      %s22 = sshll.u32 [#allocation2], 4
      %s23 = int_to_ptr.vmem [resolvable:$true] %s22
      %28 = dma.hbm_to_vmem [thread:$0]  %s1, 128, %s23, [#allocation3], 64, 64, 4
    $region9: #{padded_event_encoder.1} parent=1 // pred_fallthru
      _
    // Predicated region
    $region10: #{padded_event_encoder.1} parent=1 // pred_check
      _
    $region11: #{padded_event_encoder.1} parent=1 // pred_check_branch
      %30 = sbr.rel (0) target = $region13
    $region12: #{padded_event_encoder.1} parent=1 // pred_region
      _
    $region13: #{padded_event_encoder.1} parent=1 // pred_fallthru
      _
    // Predicated region
    $region14: #{padded_event_encoder.1} parent=1 // pred_check
      _
    $region15: #{padded_event_encoder.1} parent=1 // pred_check_branch
      %32 = sbr.rel (0) target = $region17
    $region16: #{padded_event_encoder.1} parent=1 // pred_region
      _
    $region17: #{padded_event_encoder.1} parent=1 // pred_fallthru
      _
    // Predicated region
    $region18: #{padded_event_encoder.1} parent=1 // pred_check
      _
    $region19: #{padded_event_encoder.1} parent=1 // pred_check_branch
      %34 = sbr.rel (0) target = $region21
    $region20: #{padded_event_encoder.1} parent=1 // pred_region
      _
    $region21: #{padded_event_encoder.1} parent=1 // pred_fallthru
      _
    // Predicated region
    $region22: #{padded_event_encoder.1} parent=1 // pred_check
      _
    $region23: #{padded_event_encoder.1} parent=1 // pred_check_branch
      %36 = sbr.rel (0) target = $region25
    $region24: #{padded_event_encoder.1} parent=1 // pred_region
      _
    $region25: #{padded_event_encoder.1} parent=1 // pred_fallthru
      _
    // Predicated region
    $region26: #{padded_event_encoder.1} parent=1 // pred_check
      _
    $region27: #{padded_event_encoder.1} parent=1 // pred_check_branch
      %38 = sbr.rel (0) target = $region29
    $region28: #{padded_event_encoder.1} parent=1 // pred_region
      %s40 = ssub.s32 16, 16
      %41 = vsyncadd [#allocation6], %s40
      %s43 = sshll.u32 [#allocation5], 4
      %s44 = int_to_ptr.vmem [resolvable:$true] %s43
      %46 = dma.hbm_to_vmem [thread:$0]  %s6, 16, %s44, [#allocation6]
    $region29: #{padded_event_encoder.1} parent=1 // pred_fallthru
      _
    // Predicated region
    $region30: #{padded_event_encoder.1} parent=1 // pred_check
      _
    $region31: #{padded_event_encoder.1} parent=1 // pred_check_branch
      %48 = sbr.rel (0) target = $region33
    $region32: #{padded_event_encoder.1} parent=1 // pred_region
      %49 = dma.done [#allocation3], 128
    $region33: #{padded_event_encoder.1} parent=1 // pred_fallthru
      _
    // Predicated region
    $region34: #{padded_event_encoder.1} parent=1 // pred_check
      _
    $region35: #{padded_event_encoder.1} parent=1 // pred_check_branch
      %51 = sbr.rel (0) target = $region37
    $region36: #{padded_event_encoder.1} parent=1 // pred_region
      %52 = dma.done [#allocation6], 16
    $region37: #{padded_event_encoder.1} parent=1 // pred_fallthru
      _
    %v54 = vld [vmem:[%s0] sm:$0xf]
    %v55 = vld [vmem:[#allocation2] sm:$0xf]
    %v56 = vld [vmem:[#allocation2 + $0x4] sm:$0xf]
    %v57 = vld [vmem:[%s2] sm:$0x1]
    %v59 = vlaneseq
    %v60 = vshrl.u32 %v59, 7
    %v61 = vsub.s32 0, %v60
    %v62 = vrot.slane %v57, %v61
    %v66 = vunpack.c.l.b16 %v55
    %v67 = vunpack.c.l.b16 %v56
    %v68 = vpack.c.b16 %v67, %v66
    %vm70 = vcmask 130048
    %v72 = vsel %vm70, %v54, 0
    %74 = vmatprep.subr.bf16.mxu0 0
    %75 = vmatpush1.bf16.msra.mxu0 %v68
    %76 = vmatprep.subr.bf16.mxu0 0
    %77 = vmatpush1.bf16.msra.mxu0 0
    %78 = vmatprep.subr.bf16.mxu0 0
    %79 = vmatpush1.bf16.msra.mxu0 0
    %80 = vmatprep.subr.bf16.mxu0 0
    %81 = vmatpush1.bf16.msra.mxu0 0
    %82 = vmatprep.subr.bf16.mxu0 0
    %83 = vmatpush1.bf16.msra.mxu0 0
    %84 = vmatprep.subr.bf16.mxu0 0
    %85 = vmatpush1.bf16.msra.mxu0 0
    %86 = vmatprep.subr.bf16.mxu0 0
    %87 = vmatpush1.bf16.msra.mxu0 0
    %88 = vmatprep.subr.bf16.mxu0 0
    %89 = vmatpush1.bf16.msra.mxu0 0
    %90 = vmatprep.subr.bf16.mxu0 0
    %91 = vmatpush1.bf16.msra.mxu0 0
    %92 = vmatprep.subr.bf16.mxu0 0
    %93 = vmatpush1.bf16.msra.mxu0 0
    %94 = vmatprep.subr.bf16.mxu0 0
    %95 = vmatpush1.bf16.msra.mxu0 0
    %96 = vmatprep.subr.bf16.mxu0 0
    %97 = vmatpush1.bf16.msra.mxu0 0
    %98 = vmatprep.subr.bf16.mxu0 0
    %99 = vmatpush1.bf16.msra.mxu0 0
    %100 = vmatprep.subr.bf16.mxu0 0
    %101 = vmatpush1.bf16.msra.mxu0 0
    %102 = vmatprep.subr.bf16.mxu0 0
    %103 = vmatpush1.bf16.msra.mxu0 0
    %104 = vmatprep.subr.bf16.mxu0 0
    %105 = vmatpush1.bf16.msra.mxu0 0
    %106 = vmatprep.mubr.bf16.mxu0 0
    %107 = vmatmul.mubr.bf16.gmra.mrb[0].mxu0 %v72
    %v108 = vpop.f32.mrb[0].mxu0
    %v109 = vadd.f32 %v62, %v108
    %v110 = vpop.f32.mrb[0].mxu0
    %v111 = vpop.f32.mrb[0].mxu0
    %v112 = vpop.f32.mrb[0].mxu0
    %113 = vdwg.mxu0
    %v114 = vmax.f32 %v109, 0.0
    %v115 = vpack.c.bf16 %v114, %v114
    %v116 = vld [vmem:[%s3] sm:$0xf]
    %v117 = vld [vmem:[%s3 + $0x4] sm:$0xf]
    %v118 = vld [vmem:[%s3 + $0x8] sm:$0xf]
    %v119 = vld [vmem:[%s3 + $0xc] sm:$0xf]
    %v120 = vld [vmem:[%s4] sm:$0x1]
    %v122 = vlaneseq
    %v123 = vshrl.u32 %v122, 7
    %v124 = vsub.s32 0, %v123
    %v125 = vrot.slane %v120, %v124
    %v131 = vunpack.c.l.b16 %v116
    %v132 = vunpack.c.l.b16 %v117
    %v133 = vunpack.c.l.b16 %v118
    %v134 = vunpack.c.l.b16 %v119
    %v135 = vpack.c.b16 %v132, %v131
    %v136 = vpack.c.b16 %v134, %v133
    %vm139 = vcmask 261120
    %v141 = vsel %vm139, %v115, 0
    %143 = vmatprep.subr.bf16.mxu0 0
    %144 = vmatpush1.bf16.msra.mxu0 %v135
    %145 = vmatprep.subr.bf16.mxu0 0
    %146 = vmatpush1.bf16.msra.mxu0 %v136
    %147 = vmatprep.subr.bf16.mxu0 0
    %148 = vmatpush1.bf16.msra.mxu0 0
    %149 = vmatprep.subr.bf16.mxu0 0
    %150 = vmatpush1.bf16.msra.mxu0 0
    %151 = vmatprep.subr.bf16.mxu0 0
    %152 = vmatpush1.bf16.msra.mxu0 0
    %153 = vmatprep.subr.bf16.mxu0 0
    %154 = vmatpush1.bf16.msra.mxu0 0
    %155 = vmatprep.subr.bf16.mxu0 0
    %156 = vmatpush1.bf16.msra.mxu0 0
    %157 = vmatprep.subr.bf16.mxu0 0
    %158 = vmatpush1.bf16.msra.mxu0 0
    %159 = vmatprep.subr.bf16.mxu0 0
    %160 = vmatpush1.bf16.msra.mxu0 0
    %161 = vmatprep.subr.bf16.mxu0 0
    %162 = vmatpush1.bf16.msra.mxu0 0
    %163 = vmatprep.subr.bf16.mxu0 0
    %164 = vmatpush1.bf16.msra.mxu0 0
    %165 = vmatprep.subr.bf16.mxu0 0
    %166 = vmatpush1.bf16.msra.mxu0 0
    %167 = vmatprep.subr.bf16.mxu0 0
    %168 = vmatpush1.bf16.msra.mxu0 0
    %169 = vmatprep.subr.bf16.mxu0 0
    %170 = vmatpush1.bf16.msra.mxu0 0
    %171 = vmatprep.subr.bf16.mxu0 0
    %172 = vmatpush1.bf16.msra.mxu0 0
    %173 = vmatprep.subr.bf16.mxu0 0
    %174 = vmatpush1.bf16.msra.mxu0 0
    %175 = vmatprep.mubr.bf16.mxu0 0
    %176 = vmatmul.mubr.bf16.gmra.mrb[0].mxu0 %v141
    %v177 = vpop.f32.mrb[0].mxu0
    %v178 = vadd.f32 %v125, %v177
    %v179 = vpop.f32.mrb[0].mxu0
    %v180 = vpop.f32.mrb[0].mxu0
    %v181 = vpop.f32.mrb[0].mxu0
    %182 = vdwg.mxu0
    %v183 = vmax.f32 %v178, 0.0
    %v184 = vpack.c.bf16 %v183, %v183
    %v185 = vld [vmem:[%s5] sm:$0xf]
    %v186 = vld [vmem:[%s5 + $0x4] sm:$0xf]
    %v187 = vld [vmem:[%s5 + $0x8] sm:$0xf]
    %v188 = vld [vmem:[%s5 + $0xc] sm:$0xf]
    %v189 = vld [vmem:[#allocation5] sm:$0x1]
    %v191 = vlaneseq
    %v192 = vshrl.u32 %v191, 7
    %v193 = vsub.s32 0, %v192
    %v194 = vrot.slane %v189, %v193
    %v200 = vunpack.c.l.b16 %v185
    %v201 = vunpack.c.l.b16 %v186
    %v202 = vunpack.c.l.b16 %v187
    %v203 = vunpack.c.l.b16 %v188
    %v204 = vpack.c.b16 %v201, %v200
    %v205 = vpack.c.b16 %v203, %v202
    %v209 = vsel %vm139, %v184, 0
    %211 = vmatprep.subr.bf16.mxu0 0
    %212 = vmatpush1.bf16.msra.mxu0 %v204
    %213 = vmatprep.subr.bf16.mxu0 0
    %214 = vmatpush1.bf16.msra.mxu0 %v205
    %215 = vmatprep.subr.bf16.mxu0 0
    %216 = vmatpush1.bf16.msra.mxu0 0
    %217 = vmatprep.subr.bf16.mxu0 0
    %218 = vmatpush1.bf16.msra.mxu0 0
    %219 = vmatprep.subr.bf16.mxu0 0
    %220 = vmatpush1.bf16.msra.mxu0 0
    %221 = vmatprep.subr.bf16.mxu0 0
    %222 = vmatpush1.bf16.msra.mxu0 0
    %223 = vmatprep.subr.bf16.mxu0 0
    %224 = vmatpush1.bf16.msra.mxu0 0
    %225 = vmatprep.subr.bf16.mxu0 0
    %226 = vmatpush1.bf16.msra.mxu0 0
    %227 = vmatprep.subr.bf16.mxu0 0
    %228 = vmatpush1.bf16.msra.mxu0 0
    %229 = vmatprep.subr.bf16.mxu0 0
    %230 = vmatpush1.bf16.msra.mxu0 0
    %231 = vmatprep.subr.bf16.mxu0 0
    %232 = vmatpush1.bf16.msra.mxu0 0
    %233 = vmatprep.subr.bf16.mxu0 0
    %234 = vmatpush1.bf16.msra.mxu0 0
    %235 = vmatprep.subr.bf16.mxu0 0
    %236 = vmatpush1.bf16.msra.mxu0 0
    %237 = vmatprep.subr.bf16.mxu0 0
    %238 = vmatpush1.bf16.msra.mxu0 0
    %239 = vmatprep.subr.bf16.mxu0 0
    %240 = vmatpush1.bf16.msra.mxu0 0
    %241 = vmatprep.subr.bf16.mxu0 0
    %242 = vmatpush1.bf16.msra.mxu0 0
    %243 = vmatprep.mubr.bf16.mxu0 0
    %244 = vmatmul.mubr.bf16.gmra.mrb[0].mxu0 %v209
    %v245 = vpop.f32.mrb[0].mxu0
    %v246 = vadd.f32 %v194, %v245
    %v247 = vpop.f32.mrb[0].mxu0
    %v248 = vpop.f32.mrb[0].mxu0
    %v249 = vpop.f32.mrb[0].mxu0
    %250 = vdwg.mxu0
    %251 = vst [vmem:[#allocation7] sm:$0xff] %v246
    // Predicated region
    $region38: #{padded_event_encoder.1} parent=1 // pred_check
      _
    $region39: #{padded_event_encoder.1} parent=1 // pred_check_branch
      %253 = sbr.rel (0) target = $region41
    $region40: #{padded_event_encoder.1} parent=1 // pred_region
      %s255 = ssub.s32 128, 128
      %256 = vsyncadd [#allocation4], %s255
      %s258 = sshll.u32 [#allocation7], 4
      %s259 = int_to_ptr.vmem [resolvable:$true] %s258
      %261 = dma.vmem_to_hbm [thread:$0]  %s259, 128, %s7, [#allocation4]
    $region41: #{padded_event_encoder.1} parent=1 // pred_fallthru
      _
    // Predicated region
    $region42: #{padded_event_encoder.1} parent=1 // pred_check
      _
    $region43: #{padded_event_encoder.1} parent=1 // pred_check_branch
      %263 = sbr.rel (0) target = $region45
    $region44: #{padded_event_encoder.1} parent=1 // pred_region
      %264 = dma.done [#allocation4], 128
    $region45: #{padded_event_encoder.1} parent=1 // pred_fallthru
      _
    %265 = vsyncpa [#allocation3], 1
    %266 = vsyncpa [#allocation6], 1
    %267 = vsyncpa [#allocation4], 1

</llo_original>
